<compile_context>
chip_gen: v6e
topology: v6e:2x2x1
jax: 0.10.0
libtpu: 0.0.40
codegen_flags: <defaults>
</compile_context>

<pallas_src>
import functools

import jax
import jax.numpy as jnp
from jax.experimental import pallas as pl
from jax.experimental.pallas import tpu as pltpu


def _identity_basis_kernel(theta_ref, backcast_ref, forecast_ref, *, forecast_size):
    # theta tile: [tile_b, forecast_size + backcast_size]
    # Static lane slices of the already-resident VMEM tile; no extra HBM traffic.
    forecast_ref[...] = theta_ref[:, :forecast_size]
    backcast_ref[...] = theta_ref[:, forecast_size:]


def _pick_tile_rows(B: int, P: int, itemsize: int) -> int:
    """Batch-tile rows sized by bytes (~4 MiB theta tile), multiple of 8."""
    TARGET_TILE_BYTES = 4 * 1024 * 1024
    rows = (TARGET_TILE_BYTES // max(1, P * itemsize)) // 8 * 8
    rows = max(8, rows)
    if rows >= B:
        if B > 8:
            # Guarantee >= 2 grid steps so a v7x chip can use both TensorCores
            # on the "parallel" batch axis (neutral on single-TC v5e/v6e).
            rows = max(8, ((B + 15) // 16) * 8)
            if rows >= B:
                rows = B
        else:
            rows = B  # block == full dim is always legal regardless of (8,128)
    return rows


def identity_basis_forward(theta, forecast_size: int, backcast_size: int):
    """theta: [B, forecast_size + backcast_size] -> (backcast, forecast)."""
    B, P = theta.shape
    assert P == forecast_size + backcast_size

    itemsize = jnp.dtype(theta.dtype).itemsize
    tile_b = _pick_tile_rows(B, P, itemsize)
    grid = (pl.cdiv(B, tile_b),)

    # Double-buffered in-tile + both out-tiles = 2 * (P + fc + bc) * tile_b bytes
    # = 4 * tile_b * P * itemsize.  Keep limit modest so it is safe on v7x's
    # 64 MiB VMEM while still allowing the multi-MiB tiles picked above.
    footprint = 4 * tile_b * P * itemsize
    vmem_limit = int(min(40 * 1024 * 1024, max(4 * 1024 * 1024, footprint + (2 << 20))))

    # FLOP-free, bandwidth-only op: read B*P, write B*P.
    cost = pl.CostEstimate(
        flops=0,
        transcendentals=0,
        bytes_accessed=2 * B * P * itemsize,
    )

    kernel = functools.partial(_identity_basis_kernel, forecast_size=forecast_size)

    backcast, forecast = pl.pallas_call(
        kernel,
        out_shape=(
            jax.ShapeDtypeStruct((B, backcast_size), theta.dtype),
            jax.ShapeDtypeStruct((B, forecast_size), theta.dtype),
        ),
        grid=grid,
        in_specs=[pl.BlockSpec((tile_b, P), lambda i: (i, 0))],
        out_specs=(
            pl.BlockSpec((tile_b, backcast_size), lambda i: (i, 0)),
            pl.BlockSpec((tile_b, forecast_size), lambda i: (i, 0)),
        ),
        compiler_params=pltpu.CompilerParams(
            dimension_semantics=("parallel",),
            vmem_limit_bytes=vmem_limit,
        ),
        cost_estimate=cost,
    )(theta)

    return backcast, forecast


if __name__ == "__main__":
    # Small shapes consistent with the module: theta is [B, forecast + backcast].
    backcast_size = 16
    forecast_size = 8
    batch = 4

    key = jax.random.PRNGKey(0)
    theta = jax.random.normal(
        key, (batch, forecast_size + backcast_size), dtype=jnp.float32
    )

    backcast, forecast = identity_basis_forward(theta, forecast_size, backcast_size)
    backcast = jax.block_until_ready(backcast)
    forecast = jax.block_until_ready(forecast)

    # Reference (pure JAX, using the actual identity basis matrices, matching
    # the PyTorch module: cut = forecast_size, forecast first, backcast after).
    forecast_basis = jnp.eye(forecast_size, dtype=jnp.float32)
    backcast_basis = jnp.eye(backcast_size, dtype=jnp.float32)
    ref_forecast = theta[:, :forecast_size] @ forecast_basis
    ref_backcast = theta[:, forecast_size:] @ backcast_basis

    assert backcast.shape == (batch, backcast_size)
    assert forecast.shape == (batch, forecast_size)
    assert jnp.allclose(forecast, ref_forecast, atol=1e-6)
    assert jnp.allclose(backcast, ref_backcast, atol=1e-6)

    print("KERNEL_OK")
</pallas_src>

<mosaic_0001>
module attributes {stable_mosaic.version = 11 : i64} {
  func.func @_identity_basis_kernel(%arg0: i32, %arg1: memref<4x24xf32, #tpu.memory_space<vmem>>, %arg2: memref<4x16xf32, #tpu.memory_space<vmem>>, %arg3: memref<4x8xf32, #tpu.memory_space<vmem>>) attributes {dimension_semantics = [#tpu.dimension_semantics<parallel>], iteration_bounds = array<i64: 1>, scalar_prefetch = 0 : i64, scratch_operands = 0 : i64, tpu.core_type = #tpu.core_type<tc>, window_params = [{transform_indices = @transform_0, window_bounds = array<i64: 4, 24>}, {transform_indices = @transform_1, window_bounds = array<i64: 4, 16>}, {transform_indices = @transform_2, window_bounds = array<i64: 4, 8>}]} {
    %c0 = arith.constant 0 : index
    %c0_0 = arith.constant 0 : index
    %0 = vector.load %arg1[%c0, %c0_0] : memref<4x24xf32, #tpu.memory_space<vmem>>, vector<4x8xf32>
    %c0_1 = arith.constant 0 : index
    %c0_2 = arith.constant 0 : index
    %1 = vector.load %arg3[%c0_1, %c0_2] : memref<4x8xf32, #tpu.memory_space<vmem>>, vector<4x8xf32>
    tpu.vector_store %arg3[%c0_1, %c0_2], %0 {strides = array<i32>} : memref<4x8xf32, #tpu.memory_space<vmem>>, vector<4x8xf32>,
    %c0_3 = arith.constant 0 : index
    %c8 = arith.constant 8 : index
    %2 = vector.load %arg1[%c0_3, %c8] : memref<4x24xf32, #tpu.memory_space<vmem>>, vector<4x16xf32>
    %c0_4 = arith.constant 0 : index
    %c0_5 = arith.constant 0 : index
    %3 = vector.load %arg2[%c0_4, %c0_5] : memref<4x16xf32, #tpu.memory_space<vmem>>, vector<4x16xf32>
    tpu.vector_store %arg2[%c0_4, %c0_5], %2 {strides = array<i32>} : memref<4x16xf32, #tpu.memory_space<vmem>>, vector<4x16xf32>,
    return
  }
  func.func @transform_0(%arg0: i32) -> (i32, i32) {
    %c0_i32 = arith.constant 0 : i32
    %c0_i32_0 = arith.constant 0 : i32
    return %arg0, %c0_i32 : i32, i32
  }
  func.func @transform_1(%arg0: i32) -> (i32, i32) {
    %c0_i32 = arith.constant 0 : i32
    %c0_i32_0 = arith.constant 0 : i32
    return %arg0, %c0_i32 : i32, i32
  }
  func.func @transform_2(%arg0: i32) -> (i32, i32) {
    %c0_i32 = arith.constant 0 : i32
    %c0_i32_0 = arith.constant 0 : i32
    return %arg0, %c0_i32 : i32, i32
  }
}

</mosaic_0001>

<llo_original>
// kernel: tpu_custom_call.1
$region0: #{tpu_custom_call.1}
  #allocation0 [shape = 'u32[]', space=smem, size = 0x4, offset = 0x4, fixed_abs, tag = 'smem constant byte address 0x4 - core index']
  #allocation1 [shape = 'u32[144,128]{1,0:T(1,128)}', space=vmem, size = 0x12000, scoped, tag = 'internal scratch']
  %s0 = inlined_call_operand.hbm [shape: f32[4,24], index: 0, kind: input, shape index: {}]
  %s1 = inlined_call_operand.hbm [shape: f32[4,16], index: 1, kind: output, shape index: {0}]
  %s2 = inlined_call_operand.hbm [shape: f32[4,8], index: 2, kind: output, shape index: {1}]
  %3 = xla_tuple %s1, %s2
  %s4 = sld [smem:[#allocation0]]
  $region26: #{tpu_custom_call.1} parent=0
    _
  %s6 = ssub.s32 1, %s4
  %s7 = scalar_select 0, %s6, %s4
  $region1: #{tpu_custom_call.1} parent=0
    #allocation2 [shape = 'u8[2048]{0}', space=vmem, size = 0x800, scoped, tag = 'input window, operand 0, single buffered']
    #allocation3 [shape = 's32[1]{0}', space=sflag, size = 0x4, scoped, tag = 'scoped memory for tpu_custom_call.1']
    #allocation4 [shape = 's32[1]{0}', space=sflag, size = 0x4, scoped, tag = 'scoped memory for tpu_custom_call.1']
    #allocation5 [shape = 'u8[2048]{0}', space=vmem, size = 0x800, scoped, tag = 'output window, operand 0, single buffered']
    #allocation6 [shape = 'u8[2048]{0}', space=vmem, size = 0x800, scoped, tag = 'output window, operand 1, single buffered']
    #allocation7 [shape = 's32[1]{0}', space=sflag, size = 0x4, scoped, tag = 'scoped memory for tpu_custom_call.1']
    %8 = vsyncpa [#allocation3], 0
    %9 = vsyncpa [#allocation4], 0
    %10 = vsyncpa [#allocation7], 0
    // Predicated region
    $region2: #{tpu_custom_call.1} parent=1 // pred_check
      _
    $region3: #{tpu_custom_call.1} parent=1 // pred_check_branch
      %12 = sbr.rel (0) target = $region5
    $region4: #{tpu_custom_call.1} parent=1 // pred_region
      %s14 = ssub.s32 64, 64
      %15 = vsyncadd [#allocation3], %s14
      %s17 = sshll.u32 [#allocation2], 4
      %s18 = int_to_ptr.vmem [resolvable:$true] %s17
      %20 = dma.hbm_to_vmem [thread:$0]  %s0, 64, %s18, [#allocation3]
    $region5: #{tpu_custom_call.1} parent=1 // pred_fallthru
      _
    // Predicated region
    $region6: #{tpu_custom_call.1} parent=1 // pred_check
      _
    $region7: #{tpu_custom_call.1} parent=1 // pred_check_branch
      %22 = sbr.rel (0) target = $region9
    $region8: #{tpu_custom_call.1} parent=1 // pred_region
      %23 = dma.done [#allocation3], 64
    $region9: #{tpu_custom_call.1} parent=1 // pred_fallthru
      _
    %v24 = vld [vmem:[#allocation2] sm:$0xf]
    %vm25 = vcmask 60416
    %26 = vst.msk [vmem:[#allocation6] sm:$0xf] %vm25, %v24
    %v27 = vld [vmem:[#allocation2] sm:$0xf]
    %29 = vrot.lane.b32.xlu0 %v27, 120
    %v30 = vpop.permute.xlu0 %29
    %vm32 = vcmask 125952
    %33 = vst.msk [vmem:[#allocation5] sm:$0xf] %vm32, %v30
    // Predicated region
    $region10: #{tpu_custom_call.1} parent=1 // pred_check
      _
    $region11: #{tpu_custom_call.1} parent=1 // pred_check_branch
      %35 = sbr.rel (0) target = $region13
    $region12: #{tpu_custom_call.1} parent=1 // pred_region
      %s37 = ssub.s32 64, 64
      %38 = vsyncadd [#allocation4], %s37
      %s40 = sshll.u32 [#allocation5], 4
      %s41 = int_to_ptr.vmem [resolvable:$true] %s40
      %43 = dma.vmem_to_hbm [thread:$0]  %s41, 64, %s1, [#allocation4]
    $region13: #{tpu_custom_call.1} parent=1 // pred_fallthru
      _
    // Predicated region
    $region14: #{tpu_custom_call.1} parent=1 // pred_check
      _
    $region15: #{tpu_custom_call.1} parent=1 // pred_check_branch
      %45 = sbr.rel (0) target = $region17
    $region16: #{tpu_custom_call.1} parent=1 // pred_region
      %s47 = ssub.s32 64, 64
      %48 = vsyncadd [#allocation7], %s47
      %s50 = sshll.u32 [#allocation6], 4
      %s51 = int_to_ptr.vmem [resolvable:$true] %s50
      %53 = dma.vmem_to_hbm [thread:$0]  %s51, 64, %s2, [#allocation7]
    $region17: #{tpu_custom_call.1} parent=1 // pred_fallthru
      _
    // Predicated region
    $region18: #{tpu_custom_call.1} parent=1 // pred_check
      _
    $region19: #{tpu_custom_call.1} parent=1 // pred_check_branch
      %55 = sbr.rel (0) target = $region21
    $region20: #{tpu_custom_call.1} parent=1 // pred_region
      %56 = dma.done [#allocation4], 64
    $region21: #{tpu_custom_call.1} parent=1 // pred_fallthru
      _
    // Predicated region
    $region22: #{tpu_custom_call.1} parent=1 // pred_check
      _
    $region23: #{tpu_custom_call.1} parent=1 // pred_check_branch
      %58 = sbr.rel (0) target = $region25
    $region24: #{tpu_custom_call.1} parent=1 // pred_region
      %59 = dma.done [#allocation7], 64
    $region25: #{tpu_custom_call.1} parent=1 // pred_fallthru
      _
    %60 = vsyncpa [#allocation3], 1
    %61 = vsyncpa [#allocation4], 1
    %62 = vsyncpa [#allocation7], 1

</llo_original>
